<compile_context>
chip_gen: v7x
topology: tpu7x:2x2x1
jax: 0.10.0
libtpu: 0.0.40
codegen_flags: <defaults>
</compile_context>

<pallas_src>
import jax
import jax.numpy as jnp
from jax.experimental import pallas as pl
from jax.experimental.pallas import tpu as pltpu


def _round_up(x, m):
    return ((x + m - 1) // m) * m


def _ffn_kernel(x_ref,
                w1_ref, b1_ref,
                w2_ref, b2_ref,
                w3_ref, b3_ref,
                w4_ref, b4_ref,
                w5_ref, b5_ref,
                w6_ref, b6_ref,
                o_ref):
    x = x_ref[...]  # already f32

    def dense(inp, w_ref, b_ref):
        return jnp.dot(inp, w_ref[...],
                       preferred_element_type=jnp.float32) + b_ref[...]

    # layer 1 + residual
    l1 = jnp.maximum(dense(x, w1_ref, b1_ref), 0.0)
    x1 = x + l1
    # layers 2..5 with ReLU
    x2 = jnp.maximum(dense(x1, w2_ref, b2_ref), 0.0)
    x3 = jnp.maximum(dense(x2, w3_ref, b3_ref), 0.0)
    x4 = jnp.maximum(dense(x3, w4_ref, b4_ref), 0.0)
    x5 = jnp.maximum(dense(x4, w5_ref, b5_ref), 0.0)
    # final layer (no activation)
    o_ref[...] = dense(x5, w6_ref, b6_ref).astype(o_ref.dtype)


def _pad_to(a, shape):
    """Zero-pad 2-D array `a` up to `shape` (rows/cols appended)."""
    pr = shape[0] - a.shape[0]
    pc = shape[1] - a.shape[1]
    if pr == 0 and pc == 0:
        return a
    return jnp.pad(a, ((0, pr), (0, pc)))


def residual_linear_ffnn(x, params, *, tile_m_target=512):
    """x: (..., d_model) float32.  params: dict of (w_i, b_i) with w_i shaped
    (in_features, out_features) and b_i shaped (1, out_features)."""
    *lead, d_model = x.shape
    m = 1
    for s in lead:
        m *= s
    x2d = x.reshape(m, d_model)

    output_length = params["w6"].shape[1]

    # ---- Lane-dense padded dims (multiples of 128 on the lane axis) ----
    dp = _round_up(d_model, 128)           # padded d_model
    h2, h3 = 256, 128                      # already lane-dense
    h4p, h5p = 128, 128                    # 64 -> 128, 32 -> 128
    op = _round_up(output_length, 128)     # padded output width

    # Zero-padded weights / biases (exact-semantics padding).
    w1 = _pad_to(params["w1"], (dp, dp));   b1 = _pad_to(params["b1"], (1, dp))
    w2 = _pad_to(params["w2"], (dp, h2));   b2 = _pad_to(params["b2"], (1, h2))
    w3 = _pad_to(params["w3"], (h2, h3));   b3 = _pad_to(params["b3"], (1, h3))
    w4 = _pad_to(params["w4"], (h3, h4p));  b4 = _pad_to(params["b4"], (1, h4p))
    w5 = _pad_to(params["w5"], (h4p, h5p)); b5 = _pad_to(params["b5"], (1, h5p))
    w6 = _pad_to(params["w6"], (h5p, op));  b6 = _pad_to(params["b6"], (1, op))

    # ---- Row tiling: pad M so every tile is full (no OOB on the last tile) ----
    tile_m = min(tile_m_target, _round_up(m, 8))
    m_pad = _round_up(m, tile_m)
    xp = jnp.zeros((m_pad, dp), x.dtype).at[:m, :d_model].set(x2d)

    num_tiles = pl.cdiv(m_pad, tile_m)

    # Row-tiled specs for x / out; resident (constant-index) specs for params.
    x_spec = pl.BlockSpec((tile_m, dp), lambda i: (i, 0))
    out_spec = pl.BlockSpec((tile_m, op), lambda i: (i, 0))

    def resident_spec(a):
        return pl.BlockSpec(a.shape, lambda i: (0, 0))

    weights = (w1, b1, w2, b2, w3, b3, w4, b4, w5, b5, w6, b6)
    in_specs = [x_spec] + [resident_spec(a) for a in weights]

    # ---- VMEM budget: resident params + double-buffered x/out + activations ----
    f32 = 4
    weight_bytes = sum(int(a.size) for a in weights) * f32
    act_bytes = tile_m * (dp + h2 + h3 + h4p + h5p + op) * f32
    io_bytes = 2 * tile_m * (dp + op) * f32          # double-buffered tiles
    vmem_limit = int(min(56 * 2**20,
                         max(32 * 2**20,
                             2 * (weight_bytes + act_bytes + io_bytes))))

    out = pl.pallas_call(
        _ffn_kernel,
        out_shape=jax.ShapeDtypeStruct((m_pad, op), x.dtype),
        grid=(num_tiles,),
        in_specs=in_specs,
        out_specs=out_spec,
        compiler_params=pltpu.CompilerParams(
            dimension_semantics=("parallel",),
            vmem_limit_bytes=vmem_limit),
    )(xp, *weights)

    return out[:m, :output_length].reshape(*lead, output_length)


def init_params(key, d_model, output_length):
    """Deterministic init mimicking PyTorch nn.Linear default:
    U(-1/sqrt(fan_in), 1/sqrt(fan_in)) for both weight and bias."""
    dims = [(d_model, d_model), (d_model, 256), (256, 128),
            (128, 64), (64, 32), (32, output_length)]
    params = {}
    for i, (fan_in, fan_out) in enumerate(dims, start=1):
        key, kw, kb = jax.random.split(key, 3)
        bound = 1.0 / jnp.sqrt(jnp.float32(fan_in))
        # stored as (in_features, out_features) == W.T of the PyTorch layer
        params[f"w{i}"] = jax.random.uniform(
            kw, (fan_in, fan_out), jnp.float32, -bound, bound)
        params[f"b{i}"] = jax.random.uniform(
            kb, (1, fan_out), jnp.float32, -bound, bound)
    return params


def _reference(x, params):
    """Pure-JAX reference of the same forward pass."""
    def dense(inp, w, b):
        return inp @ w + b
    l1 = jax.nn.relu(dense(x, params["w1"], params["b1"]))
    x1 = x + l1
    x2 = jax.nn.relu(dense(x1, params["w2"], params["b2"]))
    x3 = jax.nn.relu(dense(x2, params["w3"], params["b3"]))
    x4 = jax.nn.relu(dense(x3, params["w4"], params["b4"]))
    x5 = jax.nn.relu(dense(x4, params["w5"], params["b5"]))
    return dense(x5, params["w6"], params["b6"])


if __name__ == "__main__":
    batch, seq, d_model = 2, 8, 32
    output_length = 16

    key = jax.random.PRNGKey(0)
    key, kx = jax.random.split(key)
    x = jax.random.normal(kx, (batch, seq, d_model), dtype=jnp.float32)
    params = init_params(key, d_model, output_length)

    out = residual_linear_ffnn(x, params)
    out = jax.block_until_ready(out)

    ref = _reference(x, params)
    assert out.shape == (batch, seq, output_length), out.shape
    assert jnp.allclose(out, ref, atol=1e-5, rtol=1e-5), "mismatch vs reference"

    print("KERNEL_OK")
</pallas_src>

<mosaic_0001>
module attributes {stable_mosaic.version = 11 : i64} {
  func.func @_ffn_kernel(%arg0: i32, %arg1: memref<16x128xf32, #tpu.memory_space<vmem>>, %arg2: memref<128x128xf32, #tpu.memory_space<vmem>>, %arg3: memref<1x128xf32, #tpu.memory_space<vmem>>, %arg4: memref<128x256xf32, #tpu.memory_space<vmem>>, %arg5: memref<1x256xf32, #tpu.memory_space<vmem>>, %arg6: memref<256x128xf32, #tpu.memory_space<vmem>>, %arg7: memref<1x128xf32, #tpu.memory_space<vmem>>, %arg8: memref<128x128xf32, #tpu.memory_space<vmem>>, %arg9: memref<1x128xf32, #tpu.memory_space<vmem>>, %arg10: memref<128x128xf32, #tpu.memory_space<vmem>>, %arg11: memref<1x128xf32, #tpu.memory_space<vmem>>, %arg12: memref<128x128xf32, #tpu.memory_space<vmem>>, %arg13: memref<1x128xf32, #tpu.memory_space<vmem>>, %arg14: memref<16x128xf32, #tpu.memory_space<vmem>>) attributes {dimension_semantics = [#tpu.dimension_semantics<parallel>], iteration_bounds = array<i64: 1>, scalar_prefetch = 0 : i64, scratch_operands = 0 : i64, tpu.core_type = #tpu.core_type<tc>, window_params = [{transform_indices = @transform_0, window_bounds = array<i64: 16, 128>}, {pipeline_mode = #tpu.pipeline_mode<synchronous>, transform_indices = @transform_1, window_bounds = array<i64: 128, 128>}, {pipeline_mode = #tpu.pipeline_mode<synchronous>, transform_indices = @transform_2, window_bounds = array<i64: 1, 128>}, {pipeline_mode = #tpu.pipeline_mode<synchronous>, transform_indices = @transform_3, window_bounds = array<i64: 128, 256>}, {pipeline_mode = #tpu.pipeline_mode<synchronous>, transform_indices = @transform_4, window_bounds = array<i64: 1, 256>}, {pipeline_mode = #tpu.pipeline_mode<synchronous>, transform_indices = @transform_5, window_bounds = array<i64: 256, 128>}, {pipeline_mode = #tpu.pipeline_mode<synchronous>, transform_indices = @transform_6, window_bounds = array<i64: 1, 128>}, {pipeline_mode = #tpu.pipeline_mode<synchronous>, transform_indices = @transform_7, window_bounds = array<i64: 128, 128>}, {pipeline_mode = #tpu.pipeline_mode<synchronous>, transform_indices = @transform_8, window_bounds = array<i64: 1, 128>}, {pipeline_mode = #tpu.pipeline_mode<synchronous>, transform_indices = @transform_9, window_bounds = array<i64: 128, 128>}, {pipeline_mode = #tpu.pipeline_mode<synchronous>, transform_indices = @transform_10, window_bounds = array<i64: 1, 128>}, {pipeline_mode = #tpu.pipeline_mode<synchronous>, transform_indices = @transform_11, window_bounds = array<i64: 128, 128>}, {pipeline_mode = #tpu.pipeline_mode<synchronous>, transform_indices = @transform_12, window_bounds = array<i64: 1, 128>}, {transform_indices = @transform_13, window_bounds = array<i64: 16, 128>}]} {
    %c0 = arith.constant 0 : index
    %c0_0 = arith.constant 0 : index
    %0 = vector.load %arg1[%c0, %c0_0] : memref<16x128xf32, #tpu.memory_space<vmem>>, vector<16x128xf32>
    %c0_1 = arith.constant 0 : index
    %c0_2 = arith.constant 0 : index
    %1 = vector.load %arg2[%c0_1, %c0_2] : memref<128x128xf32, #tpu.memory_space<vmem>>, vector<128x128xf32>
    %cst = arith.constant dense<0.000000e+00> : vector<16x128xf32>
    %2 = tpu.matmul %0, %1, %cst {dimension_numbers = #tpu.dot_dimension_numbers<[1], [0], [0], [1], [0, 0, 1, 1], [], []>} : vector<16x128xf32>, vector<128x128xf32>, vector<16x128xf32> -> vector<16x128xf32>
    %c0_3 = arith.constant 0 : index
    %c0_4 = arith.constant 0 : index
    %3 = vector.load %arg3[%c0_3, %c0_4] : memref<1x128xf32, #tpu.memory_space<vmem>>, vector<1x128xf32>
    %4 = vector.broadcast %3 : vector<1x128xf32> to vector<16x128xf32>
    %5 = arith.addf %2, %4 : vector<16x128xf32>
    %cst_5 = arith.constant 0.000000e+00 : f32
    %6 = vector.broadcast %cst_5 : f32 to vector<16x128xf32>
    %7 = arith.maximumf %5, %6 : vector<16x128xf32>
    %8 = arith.addf %0, %7 : vector<16x128xf32>
    %c0_6 = arith.constant 0 : index
    %c0_7 = arith.constant 0 : index
    %9 = vector.load %arg4[%c0_6, %c0_7] : memref<128x256xf32, #tpu.memory_space<vmem>>, vector<128x256xf32>
    %cst_8 = arith.constant dense<0.000000e+00> : vector<16x256xf32>
    %10 = tpu.matmul %8, %9, %cst_8 {dimension_numbers = #tpu.dot_dimension_numbers<[1], [0], [0], [1], [0, 0, 1, 1], [], []>} : vector<16x128xf32>, vector<128x256xf32>, vector<16x256xf32> -> vector<16x256xf32>
    %c0_9 = arith.constant 0 : index
    %c0_10 = arith.constant 0 : index
    %11 = vector.load %arg5[%c0_9, %c0_10] : memref<1x256xf32, #tpu.memory_space<vmem>>, vector<1x256xf32>
    %12 = vector.broadcast %11 : vector<1x256xf32> to vector<16x256xf32>
    %13 = arith.addf %10, %12 : vector<16x256xf32>
    %cst_11 = arith.constant 0.000000e+00 : f32
    %14 = vector.broadcast %cst_11 : f32 to vector<16x256xf32>
    %15 = arith.maximumf %13, %14 : vector<16x256xf32>
    %c0_12 = arith.constant 0 : index
    %c0_13 = arith.constant 0 : index
    %16 = vector.load %arg6[%c0_12, %c0_13] : memref<256x128xf32, #tpu.memory_space<vmem>>, vector<256x128xf32>
    %cst_14 = arith.constant dense<0.000000e+00> : vector<16x128xf32>
    %17 = tpu.matmul %15, %16, %cst_14 {dimension_numbers = #tpu.dot_dimension_numbers<[1], [0], [0], [1], [0, 0, 1, 1], [], []>} : vector<16x256xf32>, vector<256x128xf32>, vector<16x128xf32> -> vector<16x128xf32>
    %c0_15 = arith.constant 0 : index
    %c0_16 = arith.constant 0 : index
    %18 = vector.load %arg7[%c0_15, %c0_16] : memref<1x128xf32, #tpu.memory_space<vmem>>, vector<1x128xf32>
    %19 = vector.broadcast %18 : vector<1x128xf32> to vector<16x128xf32>
    %20 = arith.addf %17, %19 : vector<16x128xf32>
    %cst_17 = arith.constant 0.000000e+00 : f32
    %21 = vector.broadcast %cst_17 : f32 to vector<16x128xf32>
    %22 = arith.maximumf %20, %21 : vector<16x128xf32>
    %c0_18 = arith.constant 0 : index
    %c0_19 = arith.constant 0 : index
    %23 = vector.load %arg8[%c0_18, %c0_19] : memref<128x128xf32, #tpu.memory_space<vmem>>, vector<128x128xf32>
    %cst_20 = arith.constant dense<0.000000e+00> : vector<16x128xf32>
    %24 = tpu.matmul %22, %23, %cst_20 {dimension_numbers = #tpu.dot_dimension_numbers<[1], [0], [0], [1], [0, 0, 1, 1], [], []>} : vector<16x128xf32>, vector<128x128xf32>, vector<16x128xf32> -> vector<16x128xf32>
    %c0_21 = arith.constant 0 : index
    %c0_22 = arith.constant 0 : index
    %25 = vector.load %arg9[%c0_21, %c0_22] : memref<1x128xf32, #tpu.memory_space<vmem>>, vector<1x128xf32>
    %26 = vector.broadcast %25 : vector<1x128xf32> to vector<16x128xf32>
    %27 = arith.addf %24, %26 : vector<16x128xf32>
    %cst_23 = arith.constant 0.000000e+00 : f32
    %28 = vector.broadcast %cst_23 : f32 to vector<16x128xf32>
    %29 = arith.maximumf %27, %28 : vector<16x128xf32>
    %c0_24 = arith.constant 0 : index
    %c0_25 = arith.constant 0 : index
    %30 = vector.load %arg10[%c0_24, %c0_25] : memref<128x128xf32, #tpu.memory_space<vmem>>, vector<128x128xf32>
    %cst_26 = arith.constant dense<0.000000e+00> : vector<16x128xf32>
    %31 = tpu.matmul %29, %30, %cst_26 {dimension_numbers = #tpu.dot_dimension_numbers<[1], [0], [0], [1], [0, 0, 1, 1], [], []>} : vector<16x128xf32>, vector<128x128xf32>, vector<16x128xf32> -> vector<16x128xf32>
    %c0_27 = arith.constant 0 : index
    %c0_28 = arith.constant 0 : index
    %32 = vector.load %arg11[%c0_27, %c0_28] : memref<1x128xf32, #tpu.memory_space<vmem>>, vector<1x128xf32>
    %33 = vector.broadcast %32 : vector<1x128xf32> to vector<16x128xf32>
    %34 = arith.addf %31, %33 : vector<16x128xf32>
    %cst_29 = arith.constant 0.000000e+00 : f32
    %35 = vector.broadcast %cst_29 : f32 to vector<16x128xf32>
    %36 = arith.maximumf %34, %35 : vector<16x128xf32>
    %c0_30 = arith.constant 0 : index
    %c0_31 = arith.constant 0 : index
    %37 = vector.load %arg12[%c0_30, %c0_31] : memref<128x128xf32, #tpu.memory_space<vmem>>, vector<128x128xf32>
    %cst_32 = arith.constant dense<0.000000e+00> : vector<16x128xf32>
    %38 = tpu.matmul %36, %37, %cst_32 {dimension_numbers = #tpu.dot_dimension_numbers<[1], [0], [0], [1], [0, 0, 1, 1], [], []>} : vector<16x128xf32>, vector<128x128xf32>, vector<16x128xf32> -> vector<16x128xf32>
    %c0_33 = arith.constant 0 : index
    %c0_34 = arith.constant 0 : index
    %39 = vector.load %arg13[%c0_33, %c0_34] : memref<1x128xf32, #tpu.memory_space<vmem>>, vector<1x128xf32>
    %40 = vector.broadcast %39 : vector<1x128xf32> to vector<16x128xf32>
    %41 = arith.addf %38, %40 : vector<16x128xf32>
    %c0_35 = arith.constant 0 : index
    %c0_36 = arith.constant 0 : index
    %42 = vector.load %arg14[%c0_35, %c0_36] : memref<16x128xf32, #tpu.memory_space<vmem>>, vector<16x128xf32>
    tpu.vector_store %arg14[%c0_35, %c0_36], %41 {strides = array<i32>} : memref<16x128xf32, #tpu.memory_space<vmem>>, vector<16x128xf32>,
    return
  }
  func.func @transform_0(%arg0: i32) -> (i32, i32) {
    %c0_i32 = arith.constant 0 : i32
    %c0_i32_0 = arith.constant 0 : i32
    return %arg0, %c0_i32 : i32, i32
  }
  func.func @transform_1(%arg0: i32) -> (i32, i32) {
    %c0_i32 = arith.constant 0 : i32
    %c0_i32_0 = arith.constant 0 : i32
    %c0_i32_1 = arith.constant 0 : i32
    return %c0_i32, %c0_i32_0 : i32, i32
  }
  func.func @transform_2(%arg0: i32) -> (i32, i32) {
    %c0_i32 = arith.constant 0 : i32
    %c0_i32_0 = arith.constant 0 : i32
    %c0_i32_1 = arith.constant 0 : i32
    return %c0_i32, %c0_i32_0 : i32, i32
  }
  func.func @transform_3(%arg0: i32) -> (i32, i32) {
    %c0_i32 = arith.constant 0 : i32
    %c0_i32_0 = arith.constant 0 : i32
    %c0_i32_1 = arith.constant 0 : i32
    return %c0_i32, %c0_i32_0 : i32, i32
  }
  func.func @transform_4(%arg0: i32) -> (i32, i32) {
    %c0_i32 = arith.constant 0 : i32
    %c0_i32_0 = arith.constant 0 : i32
    %c0_i32_1 = arith.constant 0 : i32
    return %c0_i32, %c0_i32_0 : i32, i32
  }
  func.func @transform_5(%arg0: i32) -> (i32, i32) {
    %c0_i32 = arith.constant 0 : i32
    %c0_i32_0 = arith.constant 0 : i32
    %c0_i32_1 = arith.constant 0 : i32
    return %c0_i32, %c0_i32_0 : i32, i32
  }
  func.func @transform_6(%arg0: i32) -> (i32, i32) {
    %c0_i32 = arith.constant 0 : i32
    %c0_i32_0 = arith.constant 0 : i32
    %c0_i32_1 = arith.constant 0 : i32
    return %c0_i32, %c0_i32_0 : i32, i32
  }
  func.func @transform_7(%arg0: i32) -> (i32, i32) {
    %c0_i32 = arith.constant 0 : i32
    %c0_i32_0 = arith.constant 0 : i32
    %c0_i32_1 = arith.constant 0 : i32
    return %c0_i32, %c0_i32_0 : i32, i32
  }
  func.func @transform_8(%arg0: i32) -> (i32, i32) {
    %c0_i32 = arith.constant 0 : i32
    %c0_i32_0 = arith.constant 0 : i32
    %c0_i32_1 = arith.constant 0 : i32
    return %c0_i32, %c0_i32_0 : i32, i32
  }
  func.func @transform_9(%arg0: i32) -> (i32, i32) {
    %c0_i32 = arith.constant 0 : i32
    %c0_i32_0 = arith.constant 0 : i32
    %c0_i32_1 = arith.constant 0 : i32
    return %c0_i32, %c0_i32_0 : i32, i32
  }
  func.func @transform_10(%arg0: i32) -> (i32, i32) {
    %c0_i32 = arith.constant 0 : i32
    %c0_i32_0 = arith.constant 0 : i32
    %c0_i32_1 = arith.constant 0 : i32
    return %c0_i32, %c0_i32_0 : i32, i32
  }
  func.func @transform_11(%arg0: i32) -> (i32, i32) {
    %c0_i32 = arith.constant 0 : i32
    %c0_i32_0 = arith.constant 0 : i32
    %c0_i32_1 = arith.constant 0 : i32
    return %c0_i32, %c0_i32_0 : i32, i32
  }
  func.func @transform_12(%arg0: i32) -> (i32, i32) {
    %c0_i32 = arith.constant 0 : i32
    %c0_i32_0 = arith.constant 0 : i32
    %c0_i32_1 = arith.constant 0 : i32
    return %c0_i32, %c0_i32_0 : i32, i32
  }
  func.func @transform_13(%arg0: i32) -> (i32, i32) {
    %c0_i32 = arith.constant 0 : i32
    %c0_i32_0 = arith.constant 0 : i32
    return %arg0, %c0_i32 : i32, i32
  }
}

</mosaic_0001>

<llo_original>
// kernel: tpu_custom_call.1
$region0: #{tpu_custom_call.1}
  #allocation0 [shape = 'u32[]', space=smem, size = 0x4, offset = 0x4, fixed_abs, tag = 'smem constant byte address 0x4 - core index']
  #allocation1 [shape = 'u32[144,128]{1,0:T(1,128)}', space=vmem, size = 0x12000, scoped, tag = 'internal scratch']
  %s0 = inlined_call_operand.hbm [shape: f32[16,128], index: 0, kind: input, shape index: {}]
  %s1 = inlined_call_operand.hbm [shape: f32[128,128], index: 1, kind: input, shape index: {}]
  %s2 = inlined_call_operand.vmem [shape: f32[1,128], index: 2, kind: input, shape index: {}]
  %s3 = inlined_call_operand.hbm [shape: f32[128,256], index: 3, kind: input, shape index: {}]
  %s4 = inlined_call_operand.vmem [shape: f32[1,256], index: 4, kind: input, shape index: {}]
  %s5 = inlined_call_operand.hbm [shape: f32[256,128], index: 5, kind: input, shape index: {}]
  %s6 = inlined_call_operand.vmem [shape: f32[1,128], index: 6, kind: input, shape index: {}]
  %s7 = inlined_call_operand.hbm [shape: f32[128,128], index: 7, kind: input, shape index: {}]
  %s8 = inlined_call_operand.vmem [shape: f32[1,128], index: 8, kind: input, shape index: {}]
  %s9 = inlined_call_operand.hbm [shape: f32[128,128], index: 9, kind: input, shape index: {}]
  %s10 = inlined_call_operand.vmem [shape: f32[1,128], index: 10, kind: input, shape index: {}]
  %s11 = inlined_call_operand.hbm [shape: f32[128,128], index: 11, kind: input, shape index: {}]
  %s12 = inlined_call_operand.vmem [shape: f32[1,128], index: 12, kind: input, shape index: {}]
  %s13 = inlined_call_operand.hbm [shape: f32[16,128], index: 13, kind: output, shape index: {}]
  %s14 = sld [smem:[#allocation0]]
  $region90: #{tpu_custom_call.1} parent=0
    _
  %s16 = ssub.s32 1, %s14
  %s17 = scalar_select 0, %s16, %s14
  $region1: #{tpu_custom_call.1} parent=0
    #allocation2 [shape = 'u8[8192]{0}', space=vmem, size = 0x2000, scoped, tag = 'input window, operand 0, single buffered']
    #allocation3 [shape = 's32[1]{0}', space=sflag, size = 0x4, scoped, tag = 'scoped memory for tpu_custom_call.1']
    #allocation4 [shape = 's32[1]{0}', space=sflag, size = 0x4, scoped, tag = 'scoped memory for tpu_custom_call.1']
    #allocation5 [shape = 'u8[65536]{0}', space=vmem, size = 0x10000, scoped, tag = 'input window, operand 1, single buffered']
    #allocation6 [shape = 's32[1]{0}', space=sflag, size = 0x4, scoped, tag = 'scoped memory for tpu_custom_call.1']
    #allocation7 [shape = 'u8[131072]{0}', space=vmem, size = 0x20000, scoped, tag = 'input window, operand 3, single buffered']
    #allocation8 [shape = 'u8[131072]{0}', space=vmem, size = 0x20000, scoped, tag = 'input window, operand 5, single buffered']
    #allocation9 [shape = 's32[1]{0}', space=sflag, size = 0x4, scoped, tag = 'scoped memory for tpu_custom_call.1']
    #allocation10 [shape = 'u8[65536]{0}', space=vmem, size = 0x10000, scoped, tag = 'input window, operand 7, single buffered']
    #allocation11 [shape = 'u8[65536]{0}', space=vmem, size = 0x10000, scoped, tag = 'input window, operand 9, single buffered']
    #allocation12 [shape = 's32[1]{0}', space=sflag, size = 0x4, scoped, tag = 'scoped memory for tpu_custom_call.1']
    #allocation13 [shape = 'u8[65536]{0}', space=vmem, size = 0x10000, scoped, tag = 'input window, operand 11, single buffered']
    #allocation14 [shape = 'u8[8192]{0}', space=vmem, size = 0x2000, scoped, tag = 'output window, operand 0, single buffered']
    %18 = vsyncpa [#allocation3], 0
    %19 = vsyncpa [#allocation6], 0
    %20 = vsyncpa [#allocation9], 0
    %21 = vsyncpa [#allocation12], 0
    %22 = vsyncpa [#allocation4], 0
    // Predicated region
    $region2: #{tpu_custom_call.1} parent=1 // pred_check
      _
    $region3: #{tpu_custom_call.1} parent=1 // pred_check_branch
      %24 = sbr.rel (0) target = $region5
    $region4: #{tpu_custom_call.1} parent=1 // pred_region
      %s26 = ssub.s32 256, 256
      %27 = vsyncadd [#allocation3], %s26
      %s28 = sshll.u32 [#allocation2], 4
      %s29 = int_to_ptr.vmem [resolvable:$true] %s28
      %34 = dma.hbm_to_vmem [thread:$0]  %s0, 256, %s29, [#allocation3], 128, 128, 8
    $region5: #{tpu_custom_call.1} parent=1 // pred_fallthru
      _
    // Predicated region
    $region6: #{tpu_custom_call.1} parent=1 // pred_check
      _
    $region7: #{tpu_custom_call.1} parent=1 // pred_check_branch
      %36 = sbr.rel (0) target = $region9
    $region8: #{tpu_custom_call.1} parent=1 // pred_region
      %s38 = ssub.s32 2048, 2048
      %39 = vsyncadd [#allocation6], %s38
      %s40 = sshll.u32 [#allocation5], 4
      %s41 = int_to_ptr.vmem [resolvable:$true] %s40
      %46 = dma.hbm_to_vmem [thread:$0]  %s1, 2048, %s41, [#allocation6], 128, 128, 8
    $region9: #{tpu_custom_call.1} parent=1 // pred_fallthru
      _
    // Predicated region
    $region10: #{tpu_custom_call.1} parent=1 // pred_check
      _
    $region11: #{tpu_custom_call.1} parent=1 // pred_check_branch
      %48 = sbr.rel (0) target = $region13
    $region12: #{tpu_custom_call.1} parent=1 // pred_region
      _
    $region13: #{tpu_custom_call.1} parent=1 // pred_fallthru
      _
    // Predicated region
    $region14: #{tpu_custom_call.1} parent=1 // pred_check
      _
    $region15: #{tpu_custom_call.1} parent=1 // pred_check_branch
      %50 = sbr.rel (0) target = $region17
    $region16: #{tpu_custom_call.1} parent=1 // pred_region
      %s52 = ssub.s32 4096, 4096
      %53 = vsyncadd [#allocation6], %s52
      %s54 = sshll.u32 [#allocation7], 4
      %s55 = int_to_ptr.vmem [resolvable:$true] %s54
      %60 = dma.hbm_to_vmem [thread:$0]  %s3, 4096, %s55, [#allocation6], 256, 256, 16
    $region17: #{tpu_custom_call.1} parent=1 // pred_fallthru
      _
    // Predicated region
    $region18: #{tpu_custom_call.1} parent=1 // pred_check
      _
    $region19: #{tpu_custom_call.1} parent=1 // pred_check_branch
      %62 = sbr.rel (0) target = $region21
    $region20: #{tpu_custom_call.1} parent=1 // pred_region
      _
    $region21: #{tpu_custom_call.1} parent=1 // pred_fallthru
      _
    // Predicated region
    $region22: #{tpu_custom_call.1} parent=1 // pred_check
      _
    $region23: #{tpu_custom_call.1} parent=1 // pred_check_branch
      %64 = sbr.rel (0) target = $region25
    $region24: #{tpu_custom_call.1} parent=1 // pred_region
      %s66 = ssub.s32 4096, 4096
      %67 = vsyncadd [#allocation9], %s66
      %s68 = sshll.u32 [#allocation8], 4
      %s69 = int_to_ptr.vmem [resolvable:$true] %s68
      %74 = dma.hbm_to_vmem [thread:$0]  %s5, 4096, %s69, [#allocation9], 128, 128, 8
    $region25: #{tpu_custom_call.1} parent=1 // pred_fallthru
      _
    // Predicated region
    $region26: #{tpu_custom_call.1} parent=1 // pred_check
      _
    $region27: #{tpu_custom_call.1} parent=1 // pred_check_branch
      %76 = sbr.rel (0) target = $region29
    $region28: #{tpu_custom_call.1} parent=1 // pred_region
      _
    $region29: #{tpu_custom_call.1} parent=1 // pred_fallthru
      _
    // Predicated region
    $region30: #{tpu_custom_call.1} parent=1 // pred_check
      _
    $region31: #{tpu_custom_call.1} parent=1 // pred_check_branch
      %78 = sbr.rel (0) target = $region33
    $region32: #{tpu_custom_call.1} parent=1 // pred_region
      %s80 = ssub.s32 2048, 2048
      %81 = vsyncadd [#allocation9], %s80
      %s82 = sshll.u32 [#allocation10], 4
      %s83 = int_to_ptr.vmem [resolvable:$true] %s82
      %88 = dma.hbm_to_vmem [thread:$0]  %s7, 2048, %s83, [#allocation9], 128, 128, 8
    $region33: #{tpu_custom_call.1} parent=1 // pred_fallthru
      _
    // Predicated region
    $region34: #{tpu_custom_call.1} parent=1 // pred_check
      _
    $region35: #{tpu_custom_call.1} parent=1 // pred_check_branch
      %90 = sbr.rel (0) target = $region37
    $region36: #{tpu_custom_call.1} parent=1 // pred_region
      _
    $region37: #{tpu_custom_call.1} parent=1 // pred_fallthru
      _
    // Predicated region
    $region38: #{tpu_custom_call.1} parent=1 // pred_check
      _
    $region39: #{tpu_custom_call.1} parent=1 // pred_check_branch
      %92 = sbr.rel (0) target = $region41
    $region40: #{tpu_custom_call.1} parent=1 // pred_region
      %s94 = ssub.s32 2048, 2048
      %95 = vsyncadd [#allocation12], %s94
      %s96 = sshll.u32 [#allocation11], 4
      %s97 = int_to_ptr.vmem [resolvable:$true] %s96
      %102 = dma.hbm_to_vmem [thread:$0]  %s9, 2048, %s97, [#allocation12], 128, 128, 8
    $region41: #{tpu_custom_call.1} parent=1 // pred_fallthru
      _
    // Predicated region
    $region42: #{tpu_custom_call.1} parent=1 // pred_check
      _
    $region43: #{tpu_custom_call.1} parent=1 // pred_check_branch
      %104 = sbr.rel (0) target = $region45
    $region44: #{tpu_custom_call.1} parent=1 // pred_region
      _
    $region45: #{tpu_custom_call.1} parent=1 // pred_fallthru
      _
    // Predicated region
    $region46: #{tpu_custom_call.1} parent=1 // pred_check
      _
    $region47: #{tpu_custom_call.1} parent=1 // pred_check_branch
      %106 = sbr.rel (0) target = $region49
    $region48: #{tpu_custom_call.1} parent=1 // pred_region
      %s108 = ssub.s32 2048, 2048
      %109 = vsyncadd [#allocation12], %s108
      %s110 = sshll.u32 [#allocation13], 4
      %s111 = int_to_ptr.vmem [resolvable:$true] %s110
      %116 = dma.hbm_to_vmem [thread:$0]  %s11, 2048, %s111, [#allocation12], 128, 128, 8
    $region49: #{tpu_custom_call.1} parent=1 // pred_fallthru
      _
    // Predicated region
    $region50: #{tpu_custom_call.1} parent=1 // pred_check
      _
    $region51: #{tpu_custom_call.1} parent=1 // pred_check_branch
      %118 = sbr.rel (0) target = $region53
    $region52: #{tpu_custom_call.1} parent=1 // pred_region
      _
    $region53: #{tpu_custom_call.1} parent=1 // pred_fallthru
      _
    // Predicated region
    $region54: #{tpu_custom_call.1} parent=1 // pred_check
      _
    $region55: #{tpu_custom_call.1} parent=1 // pred_check_branch
      %120 = sbr.rel (0) target = $region57
    $region56: #{tpu_custom_call.1} parent=1 // pred_region
      %121 = dma.done [#allocation3], 256
    $region57: #{tpu_custom_call.1} parent=1 // pred_fallthru
      _
    // Predicated region
    $region58: #{tpu_custom_call.1} parent=1 // pred_check
      _
    $region59: #{tpu_custom_call.1} parent=1 // pred_check_branch
      %123 = sbr.rel (0) target = $region61
    $region60: #{tpu_custom_call.1} parent=1 // pred_region
      %124 = dma.done [#allocation6], 2048
    $region61: #{tpu_custom_call.1} parent=1 // pred_fallthru
      _
    // Predicated region
    $region62: #{tpu_custom_call.1} parent=1 // pred_check
      _
    $region63: #{tpu_custom_call.1} parent=1 // pred_check_branch
      %126 = sbr.rel (0) target = $region65
    $region64: #{tpu_custom_call.1} parent=1 // pred_region
      %127 = dma.done [#allocation6], 4096
    $region65: #{tpu_custom_call.1} parent=1 // pred_fallthru
      _
    // Predicated region
    $region66: #{tpu_custom_call.1} parent=1 // pred_check
      _
    $region67: #{tpu_custom_call.1} parent=1 // pred_check_branch
      %129 = sbr.rel (0) target = $region69
    $region68: #{tpu_custom_call.1} parent=1 // pred_region
      %130 = dma.done [#allocation9], 4096
    $region69: #{tpu_custom_call.1} parent=1 // pred_fallthru
      _
    // Predicated region
    $region70: #{tpu_custom_call.1} parent=1 // pred_check
      _
    $region71: #{tpu_custom_call.1} parent=1 // pred_check_branch
      %132 = sbr.rel (0) target = $region73
    $region72: #{tpu_custom_call.1} parent=1 // pred_region
      %133 = dma.done [#allocation9], 2048
    $region73: #{tpu_custom_call.1} parent=1 // pred_fallthru
      _
    // Predicated region
    $region74: #{tpu_custom_call.1} parent=1 // pred_check
      _
    $region75: #{tpu_custom_call.1} parent=1 // pred_check_branch
      %135 = sbr.rel (0) target = $region77
    $region76: #{tpu_custom_call.1} parent=1 // pred_region
      %136 = dma.done [#allocation12], 2048
    $region77: #{tpu_custom_call.1} parent=1 // pred_fallthru
      _
    // Predicated region
    $region78: #{tpu_custom_call.1} parent=1 // pred_check
      _
    $region79: #{tpu_custom_call.1} parent=1 // pred_check_branch
      %138 = sbr.rel (0) target = $region81
    $region80: #{tpu_custom_call.1} parent=1 // pred_region
      %139 = dma.done [#allocation12], 2048
    $region81: #{tpu_custom_call.1} parent=1 // pred_fallthru
      _
    %v140 = vld [vmem:[#allocation2] sm:$0xff]
    %v141 = vld [vmem:[#allocation2 + $0x8] sm:$0xff]
    %v142 = vld [vmem:[#allocation5] sm:$0xff]
    %v143 = vld [vmem:[#allocation5 + $0x8] sm:$0xff]
    %v144 = vld [vmem:[#allocation5 + $0x10] sm:$0xff]
    %v145 = vld [vmem:[#allocation5 + $0x18] sm:$0xff]
    %v146 = vld [vmem:[#allocation5 + $0x20] sm:$0xff]
    %v147 = vld [vmem:[#allocation5 + $0x28] sm:$0xff]
    %v148 = vld [vmem:[#allocation5 + $0x30] sm:$0xff]
    %v149 = vld [vmem:[#allocation5 + $0x38] sm:$0xff]
    %v150 = vld [vmem:[#allocation5 + $0x40] sm:$0xff]
    %v151 = vld [vmem:[#allocation5 + $0x48] sm:$0xff]
    %v152 = vld [vmem:[#allocation5 + $0x50] sm:$0xff]
    %v153 = vld [vmem:[#allocation5 + $0x58] sm:$0xff]
    %v154 = vld [vmem:[#allocation5 + $0x60] sm:$0xff]
    %v155 = vld [vmem:[#allocation5 + $0x68] sm:$0xff]
    %v156 = vld [vmem:[#allocation5 + $0x70] sm:$0xff]
    %v157 = vld [vmem:[#allocation5 + $0x78] sm:$0xff]
    %v158 = vld [vmem:[%s2] sm:$0x1]
    %v160 = vlaneseq
    %v161 = vshrl.u32 %v160, 7
    %v162 = vsub.s32 0, %v161
    %v163 = vrot.slane %v158, %v162
    %165 = vmatprep.subr.mxu0 0.0
    %166 = vmatpush1.msra.mxu0 %v142
    %167 = vmatprep.subr.mxu0 0.0
    %168 = vmatpush1.msra.mxu0 %v143
    %169 = vmatprep.subr.mxu0 0.0
    %170 = vmatpush1.msra.mxu0 %v144
    %171 = vmatprep.subr.mxu0 0.0
    %172 = vmatpush1.msra.mxu0 %v145
    %173 = vmatprep.subr.mxu0 0.0
    %174 = vmatpush1.msra.mxu0 %v146
    %175 = vmatprep.subr.mxu0 0.0
    %176 = vmatpush1.msra.mxu0 %v147
    %177 = vmatprep.subr.mxu0 0.0
    %178 = vmatpush1.msra.mxu0 %v148
    %179 = vmatprep.subr.mxu0 0.0
    %180 = vmatpush1.msra.mxu0 %v149
    %181 = vmatprep.subr.mxu0 0.0
    %182 = vmatpush1.msra.mxu0 %v150
    %183 = vmatprep.subr.mxu0 0.0
    %184 = vmatpush1.msra.mxu0 %v151
    %185 = vmatprep.subr.mxu0 0.0
    %186 = vmatpush1.msra.mxu0 %v152
    %187 = vmatprep.subr.mxu0 0.0
    %188 = vmatpush1.msra.mxu0 %v153
    %189 = vmatprep.subr.mxu0 0.0
    %190 = vmatpush1.msra.mxu0 %v154
    %191 = vmatprep.subr.mxu0 0.0
    %192 = vmatpush1.msra.mxu0 %v155
    %193 = vmatprep.subr.mxu0 0.0
    %194 = vmatpush1.msra.mxu0 %v156
    %195 = vmatprep.subr.mxu0 0.0
    %196 = vmatpush1.msra.mxu0 %v157
    %197 = vmatprep.subr.mxu0 0.0
    %198 = vmatpush1.msra.mxu0 0.0
    %199 = vmatprep.subr.mxu0 0.0
    %200 = vmatpush1.msra.mxu0 0.0
    %201 = vmatprep.subr.mxu0 0.0
    %202 = vmatpush1.msra.mxu0 0.0
    %203 = vmatprep.subr.mxu0 0.0
    %204 = vmatpush1.msra.mxu0 0.0
    %205 = vmatprep.subr.mxu0 0.0
    %206 = vmatpush1.msra.mxu0 0.0
    %207 = vmatprep.subr.mxu0 0.0
    %208 = vmatpush1.msra.mxu0 0.0
    %209 = vmatprep.subr.mxu0 0.0
    %210 = vmatpush1.msra.mxu0 0.0
    %211 = vmatprep.subr.mxu0 0.0
    %212 = vmatpush1.msra.mxu0 0.0
    %213 = vmatprep.subr.mxu0 0.0
    %214 = vmatpush1.msra.mxu0 0.0
    %215 = vmatprep.subr.mxu0 0.0
    %216 = vmatpush1.msra.mxu0 0.0
    %217 = vmatprep.subr.mxu0 0.0
    %218 = vmatpush1.msra.mxu0 0.0
    %219 = vmatprep.subr.mxu0 0.0
    %220 = vmatpush1.msra.mxu0 0.0
    %221 = vmatprep.subr.mxu0 0.0
    %222 = vmatpush1.msra.mxu0 0.0
    %223 = vmatprep.subr.mxu0 0.0
    %224 = vmatpush1.msra.mxu0 0.0
    %225 = vmatprep.subr.mxu0 0.0
    %226 = vmatpush1.msra.mxu0 0.0
    %227 = vmatprep.subr.mxu0 0.0
    %228 = vmatpush1.msra.mxu0 0.0
    %229 = vmatprep.mubr.f32.mxu0 0.0
    %230 = vmatmul.mubr.f32.gmra.mrb[0].mxu0 %v140
    %v231 = vpop.f32.mrb[0].mxu0
    %v232 = vadd.f32 %v163, %v231
    %v233 = vpop.f32.mrb[0].mxu0
    %234 = vmatprep.mubr.f32.mxu0 0.0
    %235 = vmatmul.mubr.f32.gmra.mrb[0].mxu0 %v141
    %v236 = vpop.f32.mrb[0].mxu0
    %v237 = vadd.f32 %v163, %v236
    %v238 = vpop.f32.mrb[0].mxu0
    %239 = vdwg.mxu0
    %v240 = vmax.f32 %v232, 0.0
    %v241 = vmax.f32 %v237, 0.0
    %v242 = vadd.f32 %v140, %v240
    %v243 = vadd.f32 %v141, %v241
    %v244 = vld [vmem:[#allocation7] sm:$0xff]
    %v245 = vld [vmem:[#allocation7 + $0x8] sm:$0xff]
    %v246 = vld [vmem:[#allocation7 + $0x10] sm:$0xff]
    %v247 = vld [vmem:[#allocation7 + $0x18] sm:$0xff]
    %v248 = vld [vmem:[#allocation7 + $0x20] sm:$0xff]
    %v249 = vld [vmem:[#allocation7 + $0x28] sm:$0xff]
    %v250 = vld [vmem:[#allocation7 + $0x30] sm:$0xff]
    %v251 = vld [vmem:[#allocation7 + $0x38] sm:$0xff]
    %v252 = vld [vmem:[#allocation7 + $0x40] sm:$0xff]
    %v253 = vld [vmem:[#allocation7 + $0x48] sm:$0xff]
    %v254 = vld [vmem:[#allocation7 + $0x50] sm:$0xff]
    %v255 = vld [vmem:[#allocation7 + $0x58] sm:$0xff]
    %v256 = vld [vmem:[#allocation7 + $0x60] sm:$0xff]
    %v257 = vld [vmem:[#allocation7 + $0x68] sm:$0xff]
    %v258 = vld [vmem:[#allocation7 + $0x70] sm:$0xff]
    %v259 = vld [vmem:[#allocation7 + $0x78] sm:$0xff]
    %v260 = vld [vmem:[#allocation7 + $0x80] sm:$0xff]
    %v261 = vld [vmem:[#allocation7 + $0x88] sm:$0xff]
    %v262 = vld [vmem:[#allocation7 + $0x90] sm:$0xff]
    %v263 = vld [vmem:[#allocation7 + $0x98] sm:$0xff]
    %v264 = vld [vmem:[#allocation7 + $0xa0] sm:$0xff]
    %v265 = vld [vmem:[#allocation7 + $0xa8] sm:$0xff]
    %v266 = vld [vmem:[#allocation7 + $0xb0] sm:$0xff]
    %v267 = vld [vmem:[#allocation7 + $0xb8] sm:$0xff]
    %v268 = vld [vmem:[#allocation7 + $0xc0] sm:$0xff]
    %v269 = vld [vmem:[#allocation7 + $0xc8] sm:$0xff]
    %v270 = vld [vmem:[#allocation7 + $0xd0] sm:$0xff]
    %v271 = vld [vmem:[#allocation7 + $0xd8] sm:$0xff]
    %v272 = vld [vmem:[#allocation7 + $0xe0] sm:$0xff]
    %v273 = vld [vmem:[#allocation7 + $0xe8] sm:$0xff]
    %v274 = vld [vmem:[#allocation7 + $0xf0] sm:$0xff]
    %v275 = vld [vmem:[#allocation7 + $0xf8] sm:$0xff]
    %v276 = vld [vmem:[%s4] sm:$0x3]
    %v278 = vlaneseq
    %v279 = vshrl.u32 %v278, 7
    %v280 = vsub.s32 0, %v279
    %v281 = vrot.slane %v276, %v280
    %v282 = vlaneseq
    %v283 = vshrl.u32 %v282, 7
    %v284 = vsub.s32 1, %v283
    %v285 = vrot.slane %v276, %v284
    %288 = vmatprep.subr.mxu0 %v245
    %289 = vmatpush1.msra.mxu0 %v244
    %290 = vmatprep.subr.mxu0 %v247
    %291 = vmatpush1.msra.mxu0 %v246
    %292 = vmatprep.subr.mxu0 %v249
    %293 = vmatpush1.msra.mxu0 %v248
    %294 = vmatprep.subr.mxu0 %v251
    %295 = vmatpush1.msra.mxu0 %v250
    %296 = vmatprep.subr.mxu0 %v253
    %297 = vmatpush1.msra.mxu0 %v252
    %298 = vmatprep.subr.mxu0 %v255
    %299 = vmatpush1.msra.mxu0 %v254
    %300 = vmatprep.subr.mxu0 %v257
    %301 = vmatpush1.msra.mxu0 %v256
    %302 = vmatprep.subr.mxu0 %v259
    %303 = vmatpush1.msra.mxu0 %v258
    %304 = vmatprep.subr.mxu0 %v261
    %305 = vmatpush1.msra.mxu0 %v260
    %306 = vmatprep.subr.mxu0 %v263
    %307 = vmatpush1.msra.mxu0 %v262
    %308 = vmatprep.subr.mxu0 %v265
    %309 = vmatpush1.msra.mxu0 %v264
    %310 = vmatprep.subr.mxu0 %v267
    %311 = vmatpush1.msra.mxu0 %v266
    %312 = vmatprep.subr.mxu0 %v269
    %313 = vmatpush1.msra.mxu0 %v268
    %314 = vmatprep.subr.mxu0 %v271
    %315 = vmatpush1.msra.mxu0 %v270
    %316 = vmatprep.subr.mxu0 %v273
    %317 = vmatpush1.msra.mxu0 %v272
    %318 = vmatprep.subr.mxu0 %v275
    %319 = vmatpush1.msra.mxu0 %v274
    %320 = vmatprep.subr.mxu0 0.0
    %321 = vmatpush1.msra.mxu0 0.0
    %322 = vmatprep.subr.mxu0 0.0
    %323 = vmatpush1.msra.mxu0 0.0
    %324 = vmatprep.subr.mxu0 0.0
    %325 = vmatpush1.msra.mxu0 0.0
    %326 = vmatprep.subr.mxu0 0.0
    %327 = vmatpush1.msra.mxu0 0.0
    %328 = vmatprep.subr.mxu0 0.0
    %329 = vmatpush1.msra.mxu0 0.0
    %330 = vmatprep.subr.mxu0 0.0
    %331 = vmatpush1.msra.mxu0 0.0
    %332 = vmatprep.subr.mxu0 0.0
    %333 = vmatpush1.msra.mxu0 0.0
    %334 = vmatprep.subr.mxu0 0.0
    %335 = vmatpush1.msra.mxu0 0.0
    %336 = vmatprep.subr.mxu0 0.0
    %337 = vmatpush1.msra.mxu0 0.0
    %338 = vmatprep.subr.mxu0 0.0
    %339 = vmatpush1.msra.mxu0 0.0
    %340 = vmatprep.subr.mxu0 0.0
    %341 = vmatpush1.msra.mxu0 0.0
    %342 = vmatprep.subr.mxu0 0.0
    %343 = vmatpush1.msra.mxu0 0.0
    %344 = vmatprep.subr.mxu0 0.0
    %345 = vmatpush1.msra.mxu0 0.0
    %346 = vmatprep.subr.mxu0 0.0
    %347 = vmatpush1.msra.mxu0 0.0
    %348 = vmatprep.subr.mxu0 0.0
    %349 = vmatpush1.msra.mxu0 0.0
    %350 = vmatprep.subr.mxu0 0.0
    %351 = vmatpush1.msra.mxu0 0.0
    %352 = vmatprep.mubr.f32.mxu0 0.0
    %353 = vmatmul.mubr.f32.gmra.mrb[0].mxu0 %v242
    %v354 = vpop.f32.mrb[0].mxu0
    %v355 = vadd.f32 %v281, %v354
    %v356 = vpop.f32.mrb[0].mxu0
    %v357 = vadd.f32 %v285, %v356
    %358 = vmatprep.mubr.f32.mxu0 0.0
    %359 = vmatmul.mubr.f32.gmra.mrb[0].mxu0 %v243
    %v360 = vpop.f32.mrb[0].mxu0
    %v361 = vadd.f32 %v281, %v360
    %v362 = vpop.f32.mrb[0].mxu0
    %v363 = vadd.f32 %v285, %v362
    %364 = vdwg.mxu0
    %v365 = vmax.f32 %v355, 0.0
    %v366 = vmax.f32 %v357, 0.0
    %v367 = vmax.f32 %v361, 0.0
    %v368 = vmax.f32 %v363, 0.0
    %v369 = vld [vmem:[#allocation8] sm:$0xff]
    %v370 = vld [vmem:[#allocation8 + $0x8] sm:$0xff]
    %v371 = vld [vmem:[#allocation8 + $0x10] sm:$0xff]
    %v372 = vld [vmem:[#allocation8 + $0x18] sm:$0xff]
    %v373 = vld [vmem:[#allocation8 + $0x20] sm:$0xff]
    %v374 = vld [vmem:[#allocation8 + $0x28] sm:$0xff]
    %v375 = vld [vmem:[#allocation8 + $0x30] sm:$0xff]
    %v376 = vld [vmem:[#allocation8 + $0x38] sm:$0xff]
    %v377 = vld [vmem:[#allocation8 + $0x40] sm:$0xff]
    %v378 = vld [vmem:[#allocation8 + $0x48] sm:$0xff]
    %v379 = vld [vmem:[#allocation8 + $0x50] sm:$0xff]
    %v380 = vld [vmem:[#allocation8 + $0x58] sm:$0xff]
    %v381 = vld [vmem:[#allocation8 + $0x60] sm:$0xff]
    %v382 = vld [vmem:[#allocation8 + $0x68] sm:$0xff]
    %v383 = vld [vmem:[#allocation8 + $0x70] sm:$0xff]
    %v384 = vld [vmem:[#allocation8 + $0x78] sm:$0xff]
    %v385 = vld [vmem:[#allocation8 + $0x80] sm:$0xff]
    %v386 = vld [vmem:[#allocation8 + $0x88] sm:$0xff]
    %v387 = vld [vmem:[#allocation8 + $0x90] sm:$0xff]
    %v388 = vld [vmem:[#allocation8 + $0x98] sm:$0xff]
    %v389 = vld [vmem:[#allocation8 + $0xa0] sm:$0xff]
    %v390 = vld [vmem:[#allocation8 + $0xa8] sm:$0xff]
    %v391 = vld [vmem:[#allocation8 + $0xb0] sm:$0xff]
    %v392 = vld [vmem:[#allocation8 + $0xb8] sm:$0xff]
    %v393 = vld [vmem:[#allocation8 + $0xc0] sm:$0xff]
    %v394 = vld [vmem:[#allocation8 + $0xc8] sm:$0xff]
    %v395 = vld [vmem:[#allocation8 + $0xd0] sm:$0xff]
    %v396 = vld [vmem:[#allocation8 + $0xd8] sm:$0xff]
    %v397 = vld [vmem:[#allocation8 + $0xe0] sm:$0xff]
    %v398 = vld [vmem:[#allocation8 + $0xe8] sm:$0xff]
    %v399 = vld [vmem:[#allocation8 + $0xf0] sm:$0xff]
    %v400 = vld [vmem:[#allocation8 + $0xf8] sm:$0xff]
    %v401 = vld [vmem:[%s6] sm:$0x1]
    %v403 = vlaneseq
    %v404 = vshrl.u32 %v403, 7
    %v405 = vsub.s32 0, %v404
    %v406 = vrot.slane %v401, %v405
    %408 = vmatprep.subr.mxu0 0.0
    %409 = vmatpush1.msra.mxu0 %v369
    %410 = vmatprep.subr.mxu0 0.0
    %411 = vmatpush1.msra.mxu0 %v370
    %412 = vmatprep.subr.mxu0 0.0
    %413 = vmatpush1.msra.mxu0 %v371
    %414 = vmatprep.subr.mxu0 0.0
    %415 = vmatpush1.msra.mxu0 %v372
    %416 = vmatprep.subr.mxu0 0.0
    %417 = vmatpush1.msra.mxu0 %v373
    %418 = vmatprep.subr.mxu0 0.0
    %419 = vmatpush1.msra.mxu0 %v374
    %420 = vmatprep.subr.mxu0 0.0
    %421 = vmatpush1.msra.mxu0 %v375
    %422 = vmatprep.subr.mxu0 0.0
    %423 = vmatpush1.msra.mxu0 %v376
    %424 = vmatprep.subr.mxu0 0.0
    %425 = vmatpush1.msra.mxu0 %v377
    %426 = vmatprep.subr.mxu0 0.0
    %427 = vmatpush1.msra.mxu0 %v378
    %428 = vmatprep.subr.mxu0 0.0
    %429 = vmatpush1.msra.mxu0 %v379
    %430 = vmatprep.subr.mxu0 0.0
    %431 = vmatpush1.msra.mxu0 %v380
    %432 = vmatprep.subr.mxu0 0.0
    %433 = vmatpush1.msra.mxu0 %v381
    %434 = vmatprep.subr.mxu0 0.0
    %435 = vmatpush1.msra.mxu0 %v382
    %436 = vmatprep.subr.mxu0 0.0
    %437 = vmatpush1.msra.mxu0 %v383
    %438 = vmatprep.subr.mxu0 0.0
    %439 = vmatpush1.msra.mxu0 %v384
    %440 = vmatprep.subr.mxu0 0.0
    %441 = vmatpush1.msra.mxu0 %v385
    %442 = vmatprep.subr.mxu0 0.0
    %443 = vmatpush1.msra.mxu0 %v386
    %444 = vmatprep.subr.mxu0 0.0
    %445 = vmatpush1.msra.mxu0 %v387
    %446 = vmatprep.subr.mxu0 0.0
    %447 = vmatpush1.msra.mxu0 %v388
    %448 = vmatprep.subr.mxu0 0.0
    %449 = vmatpush1.msra.mxu0 %v389
    %450 = vmatprep.subr.mxu0 0.0
    %451 = vmatpush1.msra.mxu0 %v390
    %452 = vmatprep.subr.mxu0 0.0
    %453 = vmatpush1.msra.mxu0 %v391
    %454 = vmatprep.subr.mxu0 0.0
    %455 = vmatpush1.msra.mxu0 %v392
    %456 = vmatprep.subr.mxu0 0.0
    %457 = vmatpush1.msra.mxu0 %v393
    %458 = vmatprep.subr.mxu0 0.0
    %459 = vmatpush1.msra.mxu0 %v394
    %460 = vmatprep.subr.mxu0 0.0
    %461 = vmatpush1.msra.mxu0 %v395
    %462 = vmatprep.subr.mxu0 0.0
    %463 = vmatpush1.msra.mxu0 %v396
    %464 = vmatprep.subr.mxu0 0.0
    %465 = vmatpush1.msra.mxu0 %v397
    %466 = vmatprep.subr.mxu0 0.0
    %467 = vmatpush1.msra.mxu0 %v398
    %468 = vmatprep.subr.mxu0 0.0
    %469 = vmatpush1.msra.mxu0 %v399
    %470 = vmatprep.subr.mxu0 0.0
    %471 = vmatpush1.msra.mxu0 %v400
    %472 = vmatprep.mubr.f32.mxu0 %v366
    %473 = vmatmul.mubr.f32.gmra.mrb[0].mxu0 %v365
    %v474 = vpop.f32.mrb[0].mxu0
    %v475 = vadd.f32 %v406, %v474
    %v476 = vpop.f32.mrb[0].mxu0
    %477 = vmatprep.mubr.f32.mxu0 %v368
    %478 = vmatmul.mubr.f32.gmra.mrb[0].mxu0 %v367
    %v479 = vpop.f32.mrb[0].mxu0
    %v480 = vadd.f32 %v406, %v479
    %v481 = vpop.f32.mrb[0].mxu0
    %482 = vdwg.mxu0
    %v483 = vmax.f32 %v475, 0.0
    %v484 = vmax.f32 %v480, 0.0
    %v485 = vld [vmem:[#allocation10] sm:$0xff]
    %v486 = vld [vmem:[#allocation10 + $0x8] sm:$0xff]
    %v487 = vld [vmem:[#allocation10 + $0x10] sm:$0xff]
    %v488 = vld [vmem:[#allocation10 + $0x18] sm:$0xff]
    %v489 = vld [vmem:[#allocation10 + $0x20] sm:$0xff]
    %v490 = vld [vmem:[#allocation10 + $0x28] sm:$0xff]
    %v491 = vld [vmem:[#allocation10 + $0x30] sm:$0xff]
    %v492 = vld [vmem:[#allocation10 + $0x38] sm:$0xff]
    %v493 = vld [vmem:[#allocation10 + $0x40] sm:$0xff]
    %v494 = vld [vmem:[#allocation10 + $0x48] sm:$0xff]
    %v495 = vld [vmem:[#allocation10 + $0x50] sm:$0xff]
    %v496 = vld [vmem:[#allocation10 + $0x58] sm:$0xff]
    %v497 = vld [vmem:[#allocation10 + $0x60] sm:$0xff]
    %v498 = vld [vmem:[#allocation10 + $0x68] sm:$0xff]
    %v499 = vld [vmem:[#allocation10 + $0x70] sm:$0xff]
    %v500 = vld [vmem:[#allocation10 + $0x78] sm:$0xff]
    %v501 = vld [vmem:[%s8] sm:$0x1]
    %v503 = vlaneseq
    %v504 = vshrl.u32 %v503, 7
    %v505 = vsub.s32 0, %v504
    %v506 = vrot.slane %v501, %v505
    %508 = vmatprep.subr.mxu0 0.0
    %509 = vmatpush1.msra.mxu0 %v485
    %510 = vmatprep.subr.mxu0 0.0
    %511 = vmatpush1.msra.mxu0 %v486
    %512 = vmatprep.subr.mxu0 0.0
    %513 = vmatpush1.msra.mxu0 %v487
    %514 = vmatprep.subr.mxu0 0.0
    %515 = vmatpush1.msra.mxu0 %v488
    %516 = vmatprep.subr.mxu0 0.0
    %517 = vmatpush1.msra.mxu0 %v489
    %518 = vmatprep.subr.mxu0 0.0
    %519 = vmatpush1.msra.mxu0 %v490
    %520 = vmatprep.subr.mxu0 0.0
    %521 = vmatpush1.msra.mxu0 %v491
    %522 = vmatprep.subr.mxu0 0.0
    %523 = vmatpush1.msra.mxu0 %v492
    %524 = vmatprep.subr.mxu0 0.0
    %525 = vmatpush1.msra.mxu0 %v493
    %526 = vmatprep.subr.mxu0 0.0
    %527 = vmatpush1.msra.mxu0 %v494
    %528 = vmatprep.subr.mxu0 0.0
    %529 = vmatpush1.msra.mxu0 %v495
    %530 = vmatprep.subr.mxu0 0.0
    %531 = vmatpush1.msra.mxu0 %v496
    %532 = vmatprep.subr.mxu0 0.0
    %533 = vmatpush1.msra.mxu0 %v497
    %534 = vmatprep.subr.mxu0 0.0
    %535 = vmatpush1.msra.mxu0 %v498
    %536 = vmatprep.subr.mxu0 0.0
    %537 = vmatpush1.msra.mxu0 %v499
    %538 = vmatprep.subr.mxu0 0.0
    %539 = vmatpush1.msra.mxu0 %v500
    %540 = vmatprep.subr.mxu0 0.0
    %541 = vmatpush1.msra.mxu0 0.0
    %542 = vmatprep.subr.mxu0 0.0
    %543 = vmatpush1.msra.mxu0 0.0
    %544 = vmatprep.subr.mxu0 0.0
    %545 = vmatpush1.msra.mxu0 0.0
    %546 = vmatprep.subr.mxu0 0.0
    %547 = vmatpush1.msra.mxu0 0.0
    %548 = vmatprep.subr.mxu0 0.0
    %549 = vmatpush1.msra.mxu0 0.0
    %550 = vmatprep.subr.mxu0 0.0
    %551 = vmatpush1.msra.mxu0 0.0
    %552 = vmatprep.subr.mxu0 0.0
    %553 = vmatpush1.msra.mxu0 0.0
    %554 = vmatprep.subr.mxu0 0.0
    %555 = vmatpush1.msra.mxu0 0.0
    %556 = vmatprep.subr.mxu0 0.0
    %557 = vmatpush1.msra.mxu0 0.0
    %558 = vmatprep.subr.mxu0 0.0
    %559 = vmatpush1.msra.mxu0 0.0
    %560 = vmatprep.subr.mxu0 0.0
    %561 = vmatpush1.msra.mxu0 0.0
    %562 = vmatprep.subr.mxu0 0.0
    %563 = vmatpush1.msra.mxu0 0.0
    %564 = vmatprep.subr.mxu0 0.0
    %565 = vmatpush1.msra.mxu0 0.0
    %566 = vmatprep.subr.mxu0 0.0
    %567 = vmatpush1.msra.mxu0 0.0
    %568 = vmatprep.subr.mxu0 0.0
    %569 = vmatpush1.msra.mxu0 0.0
    %570 = vmatprep.subr.mxu0 0.0
    %571 = vmatpush1.msra.mxu0 0.0
    %572 = vmatprep.mubr.f32.mxu0 0.0
    %573 = vmatmul.mubr.f32.gmra.mrb[0].mxu0 %v483
    %v574 = vpop.f32.mrb[0].mxu0
    %v575 = vadd.f32 %v506, %v574
    %v576 = vpop.f32.mrb[0].mxu0
    %577 = vmatprep.mubr.f32.mxu0 0.0
    %578 = vmatmul.mubr.f32.gmra.mrb[0].mxu0 %v484
    %v579 = vpop.f32.mrb[0].mxu0
    %v580 = vadd.f32 %v506, %v579
    %v581 = vpop.f32.mrb[0].mxu0
    %582 = vdwg.mxu0
    %v583 = vmax.f32 %v575, 0.0
    %v584 = vmax.f32 %v580, 0.0
    %v585 = vld [vmem:[#allocation11] sm:$0xff]
    %v586 = vld [vmem:[#allocation11 + $0x8] sm:$0xff]
    %v587 = vld [vmem:[#allocation11 + $0x10] sm:$0xff]
    %v588 = vld [vmem:[#allocation11 + $0x18] sm:$0xff]
    %v589 = vld [vmem:[#allocation11 + $0x20] sm:$0xff]
    %v590 = vld [vmem:[#allocation11 + $0x28] sm:$0xff]
    %v591 = vld [vmem:[#allocation11 + $0x30] sm:$0xff]
    %v592 = vld [vmem:[#allocation11 + $0x38] sm:$0xff]
    %v593 = vld [vmem:[#allocation11 + $0x40] sm:$0xff]
    %v594 = vld [vmem:[#allocation11 + $0x48] sm:$0xff]
    %v595 = vld [vmem:[#allocation11 + $0x50] sm:$0xff]
    %v596 = vld [vmem:[#allocation11 + $0x58] sm:$0xff]
    %v597 = vld [vmem:[#allocation11 + $0x60] sm:$0xff]
    %v598 = vld [vmem:[#allocation11 + $0x68] sm:$0xff]
    %v599 = vld [vmem:[#allocation11 + $0x70] sm:$0xff]
    %v600 = vld [vmem:[#allocation11 + $0x78] sm:$0xff]
    %v601 = vld [vmem:[%s10] sm:$0x1]
    %v603 = vlaneseq
    %v604 = vshrl.u32 %v603, 7
    %v605 = vsub.s32 0, %v604
    %v606 = vrot.slane %v601, %v605
    %608 = vmatprep.subr.mxu0 0.0
    %609 = vmatpush1.msra.mxu0 %v585
    %610 = vmatprep.subr.mxu0 0.0
    %611 = vmatpush1.msra.mxu0 %v586
    %612 = vmatprep.subr.mxu0 0.0
    %613 = vmatpush1.msra.mxu0 %v587
    %614 = vmatprep.subr.mxu0 0.0
    %615 = vmatpush1.msra.mxu0 %v588
    %616 = vmatprep.subr.mxu0 0.0
    %617 = vmatpush1.msra.mxu0 %v589
    %618 = vmatprep.subr.mxu0 0.0
    %619 = vmatpush1.msra.mxu0 %v590
    %620 = vmatprep.subr.mxu0 0.0
    %621 = vmatpush1.msra.mxu0 %v591
    %622 = vmatprep.subr.mxu0 0.0
    %623 = vmatpush1.msra.mxu0 %v592
    %624 = vmatprep.subr.mxu0 0.0
    %625 = vmatpush1.msra.mxu0 %v593
    %626 = vmatprep.subr.mxu0 0.0
    %627 = vmatpush1.msra.mxu0 %v594
    %628 = vmatprep.subr.mxu0 0.0
    %629 = vmatpush1.msra.mxu0 %v595
    %630 = vmatprep.subr.mxu0 0.0
    %631 = vmatpush1.msra.mxu0 %v596
    %632 = vmatprep.subr.mxu0 0.0
    %633 = vmatpush1.msra.mxu0 %v597
    %634 = vmatprep.subr.mxu0 0.0
    %635 = vmatpush1.msra.mxu0 %v598
    %636 = vmatprep.subr.mxu0 0.0
    %637 = vmatpush1.msra.mxu0 %v599
    %638 = vmatprep.subr.mxu0 0.0
    %639 = vmatpush1.msra.mxu0 %v600
    %640 = vmatprep.subr.mxu0 0.0
    %641 = vmatpush1.msra.mxu0 0.0
    %642 = vmatprep.subr.mxu0 0.0
    %643 = vmatpush1.msra.mxu0 0.0
    %644 = vmatprep.subr.mxu0 0.0
    %645 = vmatpush1.msra.mxu0 0.0
    %646 = vmatprep.subr.mxu0 0.0
    %647 = vmatpush1.msra.mxu0 0.0
    %648 = vmatprep.subr.mxu0 0.0
    %649 = vmatpush1.msra.mxu0 0.0
    %650 = vmatprep.subr.mxu0 0.0
    %651 = vmatpush1.msra.mxu0 0.0
    %652 = vmatprep.subr.mxu0 0.0
    %653 = vmatpush1.msra.mxu0 0.0
    %654 = vmatprep.subr.mxu0 0.0
    %655 = vmatpush1.msra.mxu0 0.0
    %656 = vmatprep.subr.mxu0 0.0
    %657 = vmatpush1.msra.mxu0 0.0
    %658 = vmatprep.subr.mxu0 0.0
    %659 = vmatpush1.msra.mxu0 0.0
    %660 = vmatprep.subr.mxu0 0.0
    %661 = vmatpush1.msra.mxu0 0.0
    %662 = vmatprep.subr.mxu0 0.0
    %663 = vmatpush1.msra.mxu0 0.0
    %664 = vmatprep.subr.mxu0 0.0
    %665 = vmatpush1.msra.mxu0 0.0
    %666 = vmatprep.subr.mxu0 0.0
    %667 = vmatpush1.msra.mxu0 0.0
    %668 = vmatprep.subr.mxu0 0.0
    %669 = vmatpush1.msra.mxu0 0.0
    %670 = vmatprep.subr.mxu0 0.0
    %671 = vmatpush1.msra.mxu0 0.0
    %672 = vmatprep.mubr.f32.mxu0 0.0
    %673 = vmatmul.mubr.f32.gmra.mrb[0].mxu0 %v583
    %v674 = vpop.f32.mrb[0].mxu0
    %v675 = vadd.f32 %v606, %v674
    %v676 = vpop.f32.mrb[0].mxu0
    %677 = vmatprep.mubr.f32.mxu0 0.0
    %678 = vmatmul.mubr.f32.gmra.mrb[0].mxu0 %v584
    %v679 = vpop.f32.mrb[0].mxu0
    %v680 = vadd.f32 %v606, %v679
    %v681 = vpop.f32.mrb[0].mxu0
    %682 = vdwg.mxu0
    %v683 = vmax.f32 %v675, 0.0
    %v684 = vmax.f32 %v680, 0.0
    %v685 = vld [vmem:[#allocation13] sm:$0xff]
    %v686 = vld [vmem:[#allocation13 + $0x8] sm:$0xff]
    %v687 = vld [vmem:[#allocation13 + $0x10] sm:$0xff]
    %v688 = vld [vmem:[#allocation13 + $0x18] sm:$0xff]
    %v689 = vld [vmem:[#allocation13 + $0x20] sm:$0xff]
    %v690 = vld [vmem:[#allocation13 + $0x28] sm:$0xff]
    %v691 = vld [vmem:[#allocation13 + $0x30] sm:$0xff]
    %v692 = vld [vmem:[#allocation13 + $0x38] sm:$0xff]
    %v693 = vld [vmem:[#allocation13 + $0x40] sm:$0xff]
    %v694 = vld [vmem:[#allocation13 + $0x48] sm:$0xff]
    %v695 = vld [vmem:[#allocation13 + $0x50] sm:$0xff]
    %v696 = vld [vmem:[#allocation13 + $0x58] sm:$0xff]
    %v697 = vld [vmem:[#allocation13 + $0x60] sm:$0xff]
    %v698 = vld [vmem:[#allocation13 + $0x68] sm:$0xff]
    %v699 = vld [vmem:[#allocation13 + $0x70] sm:$0xff]
    %v700 = vld [vmem:[#allocation13 + $0x78] sm:$0xff]
    %v701 = vld [vmem:[%s12] sm:$0x1]
    %v703 = vlaneseq
    %v704 = vshrl.u32 %v703, 7
    %v705 = vsub.s32 0, %v704
    %v706 = vrot.slane %v701, %v705
    %708 = vmatprep.subr.mxu0 0.0
    %709 = vmatpush1.msra.mxu0 %v685
    %710 = vmatprep.subr.mxu0 0.0
    %711 = vmatpush1.msra.mxu0 %v686
    %712 = vmatprep.subr.mxu0 0.0
    %713 = vmatpush1.msra.mxu0 %v687
    %714 = vmatprep.subr.mxu0 0.0
    %715 = vmatpush1.msra.mxu0 %v688
    %716 = vmatprep.subr.mxu0 0.0
    %717 = vmatpush1.msra.mxu0 %v689
    %718 = vmatprep.subr.mxu0 0.0
    %719 = vmatpush1.msra.mxu0 %v690
    %720 = vmatprep.subr.mxu0 0.0
    %721 = vmatpush1.msra.mxu0 %v691
    %722 = vmatprep.subr.mxu0 0.0
    %723 = vmatpush1.msra.mxu0 %v692
    %724 = vmatprep.subr.mxu0 0.0
    %725 = vmatpush1.msra.mxu0 %v693
    %726 = vmatprep.subr.mxu0 0.0
    %727 = vmatpush1.msra.mxu0 %v694
    %728 = vmatprep.subr.mxu0 0.0
    %729 = vmatpush1.msra.mxu0 %v695
    %730 = vmatprep.subr.mxu0 0.0
    %731 = vmatpush1.msra.mxu0 %v696
    %732 = vmatprep.subr.mxu0 0.0
    %733 = vmatpush1.msra.mxu0 %v697
    %734 = vmatprep.subr.mxu0 0.0
    %735 = vmatpush1.msra.mxu0 %v698
    %736 = vmatprep.subr.mxu0 0.0
    %737 = vmatpush1.msra.mxu0 %v699
    %738 = vmatprep.subr.mxu0 0.0
    %739 = vmatpush1.msra.mxu0 %v700
    %740 = vmatprep.subr.mxu0 0.0
    %741 = vmatpush1.msra.mxu0 0.0
    %742 = vmatprep.subr.mxu0 0.0
    %743 = vmatpush1.msra.mxu0 0.0
    %744 = vmatprep.subr.mxu0 0.0
    %745 = vmatpush1.msra.mxu0 0.0
    %746 = vmatprep.subr.mxu0 0.0
    %747 = vmatpush1.msra.mxu0 0.0
    %748 = vmatprep.subr.mxu0 0.0
    %749 = vmatpush1.msra.mxu0 0.0
    %750 = vmatprep.subr.mxu0 0.0
    %751 = vmatpush1.msra.mxu0 0.0
    %752 = vmatprep.subr.mxu0 0.0
    %753 = vmatpush1.msra.mxu0 0.0
    %754 = vmatprep.subr.mxu0 0.0
    %755 = vmatpush1.msra.mxu0 0.0
    %756 = vmatprep.subr.mxu0 0.0
    %757 = vmatpush1.msra.mxu0 0.0
    %758 = vmatprep.subr.mxu0 0.0
    %759 = vmatpush1.msra.mxu0 0.0
    %760 = vmatprep.subr.mxu0 0.0
    %761 = vmatpush1.msra.mxu0 0.0
    %762 = vmatprep.subr.mxu0 0.0
    %763 = vmatpush1.msra.mxu0 0.0
    %764 = vmatprep.subr.mxu0 0.0
    %765 = vmatpush1.msra.mxu0 0.0
    %766 = vmatprep.subr.mxu0 0.0
    %767 = vmatpush1.msra.mxu0 0.0
    %768 = vmatprep.subr.mxu0 0.0
    %769 = vmatpush1.msra.mxu0 0.0
    %770 = vmatprep.subr.mxu0 0.0
    %771 = vmatpush1.msra.mxu0 0.0
    %772 = vmatprep.mubr.f32.mxu0 0.0
    %773 = vmatmul.mubr.f32.gmra.mrb[0].mxu0 %v683
    %v774 = vpop.f32.mrb[0].mxu0
    %v775 = vadd.f32 %v706, %v774
    %v776 = vpop.f32.mrb[0].mxu0
    %777 = vmatprep.mubr.f32.mxu0 0.0
    %778 = vmatmul.mubr.f32.gmra.mrb[0].mxu0 %v684
    %v779 = vpop.f32.mrb[0].mxu0
    %v780 = vadd.f32 %v706, %v779
    %v781 = vpop.f32.mrb[0].mxu0
    %782 = vdwg.mxu0
    %783 = vst [vmem:[#allocation14] sm:$0xff] %v775
    %784 = vst [vmem:[#allocation14 + $0x8] sm:$0xff] %v780
    // Predicated region
    $region82: #{tpu_custom_call.1} parent=1 // pred_check
      _
    $region83: #{tpu_custom_call.1} parent=1 // pred_check_branch
      %786 = sbr.rel (0) target = $region85
    $region84: #{tpu_custom_call.1} parent=1 // pred_region
      %s788 = ssub.s32 256, 256
      %789 = vsyncadd [#allocation4], %s788
      %s790 = sshll.u32 [#allocation14], 4
      %s791 = int_to_ptr.vmem [resolvable:$true] %s790
      %796 = dma.vmem_to_hbm [thread:$0]  %s791, 256, %s13, [#allocation4], 128, 128, 8
    $region85: #{tpu_custom_call.1} parent=1 // pred_fallthru
      _
    // Predicated region
    $region86: #{tpu_custom_call.1} parent=1 // pred_check
      _
    $region87: #{tpu_custom_call.1} parent=1 // pred_check_branch
      %798 = sbr.rel (0) target = $region89
    $region88: #{tpu_custom_call.1} parent=1 // pred_region
      %799 = dma.done [#allocation4], 256
    $region89: #{tpu_custom_call.1} parent=1 // pred_fallthru
      _
    %800 = vsyncpa [#allocation3], 1
    %801 = vsyncpa [#allocation6], 1
    %802 = vsyncpa [#allocation9], 1
    %803 = vsyncpa [#allocation12], 1
    %804 = vsyncpa [#allocation4], 1

</llo_original>
